<compile_context>
chip_gen: v6e
topology: v6e:2x2x1
jax: 0.10.0
libtpu: 0.0.40
codegen_flags: <defaults>
</compile_context>

<pallas_src>
import functools

import jax
import jax.numpy as jnp
from jax.experimental import pallas as pl
from jax.experimental.pallas import tpu as pltpu

BN_EPS = 1e-5
LANES = 128


def _round_up(x, m):
    return ((x + m - 1) // m) * m


def _vmem_cap_bytes():
    """Physical VMEM capacity (per TensorCore); conservative fallback = v7x."""
    try:
        info = pltpu.get_tpu_info()
        for name in ("vmem_capacity_bytes", "vmem_capacity", "vmem_bytes"):
            cap = getattr(info, name, None)
            if cap:
                return int(cap)
    except Exception:
        pass
    return 64 << 20


_VMEM_BUDGET = int(0.75 * _vmem_cap_bytes())   # 96 MiB on v5e/v6e, 48 MiB on v7x


def _vmem_limit_bytes(tm, in_dim, out_dim, in_bytes, out_bytes):
    """Per-call VMEM budget from the actual working set (no double counting):
    double-buffered activation tiles, single-buffered bf16 weight, small
    per-column vectors, plus compiler scratch slack; clamped to 75% of the
    physical VMEM of the current chip generation."""
    act_in = 2 * tm * in_dim * in_bytes          # double-buffered input tile
    act_out = 2 * tm * out_dim * out_bytes       # double-buffered output tile
    weight = in_dim * out_dim * 2                # bf16, single-buffered (resident)
    vectors = 8 * (in_dim + out_dim) * 4         # s, t, b, per-tile stats
    est = act_in + act_out + weight + vectors + (4 << 20)
    return int(min(max(est, 16 << 20), _VMEM_BUDGET))


def _layer_kernel(normalize_input, emit_stats, tm, n_rows, has_pad_rows, *refs):
    """One fused MLP layer.

    refs = (inp, [s, t], W, [b], out, [part_sum, part_sumsq])
      inp          : (tm, Din)    f32 (first layer) or bf16 (later layers)
      s, t         : (1, Din)     f32  folded BN scale/shift for the input
      W            : (Din, Dout)  bf16 (whole array, resident in VMEM)
      b            : (1, Dout)    f32  only for the final (stat-less) layer
      out          : (tm, Dout)   bf16 (hidden) / f32 (final) linear output
      part_sum(sq) : (1,1,Dout)   f32  per-tile column statistics of the f32 z
    """
    pos = 0
    inp_ref = refs[pos]; pos += 1
    if normalize_input:
        s_ref, t_ref = refs[pos], refs[pos + 1]; pos += 2
    w_ref = refs[pos]; pos += 1
    b_ref = None
    if not emit_stats:
        b_ref = refs[pos]; pos += 1
    out_ref = refs[pos]; pos += 1
    if emit_stats:
        sum_ref, sumsq_ref = refs[pos], refs[pos + 1]

    x = inp_ref[...]
    if normalize_input:
        # Folded BatchNorm + affine + ReLU: one f32 fma + one max per element.
        x = jnp.maximum(x.astype(jnp.float32) * s_ref[...] + t_ref[...], 0.0)

    # bf16 MXU matmul, f32 accumulation.
    z = jnp.dot(x.astype(jnp.bfloat16), w_ref[...],
                preferred_element_type=jnp.float32)
    if b_ref is not None:
        z = z + b_ref[...]
    out_ref[...] = z.astype(out_ref.dtype)       # bf16 store for hidden layers

    if emit_stats:
        def _unmasked():
            sum_ref[...] = jnp.sum(z, axis=0, keepdims=True)[None]
            sumsq_ref[...] = jnp.sum(z * z, axis=0, keepdims=True)[None]

        if has_pad_rows:
            # Only the last tile can contain padded rows (padding is at the end).
            i = pl.program_id(0)
            is_boundary = i == pl.num_programs(0) - 1

            @pl.when(is_boundary)
            def _():
                rows = i * tm + jax.lax.broadcasted_iota(jnp.int32, z.shape, 0)
                valid = (rows < n_rows).astype(jnp.float32)
                zm = z * valid
                sum_ref[...] = jnp.sum(zm, axis=0, keepdims=True)[None]
                sumsq_ref[...] = jnp.sum(zm * z, axis=0, keepdims=True)[None]

            @pl.when(jnp.logical_not(is_boundary))
            def _():
                _unmasked()
        else:
            _unmasked()


def _run_layer(inp, w_bf16, s, t, b, *, emit_stats, tm, n_rows, out_dtype):
    """One batch-tiled pallas_call for a single MLP layer."""
    n_pad, in_dim = inp.shape
    out_dim = w_bf16.shape[1]
    num_tiles = n_pad // tm
    normalize_input = s is not None
    has_pad_rows = n_pad != n_rows

    in_specs = [pl.BlockSpec((tm, in_dim), lambda i: (i, 0))]
    operands = [inp]
    if normalize_input:
        in_specs += [pl.BlockSpec((1, in_dim), lambda i: (0, 0))] * 2
        operands += [s, t]
    # Grid-invariant weight: whole array resident in VMEM, single-buffered.
    in_specs.append(pl.BlockSpec(memory_space=pltpu.MemorySpace.VMEM))
    operands.append(w_bf16)
    if b is not None:
        in_specs.append(pl.BlockSpec((1, out_dim), lambda i: (0, 0)))
        operands.append(b)

    out_shapes = [jax.ShapeDtypeStruct((n_pad, out_dim), out_dtype)]
    out_specs = [pl.BlockSpec((tm, out_dim), lambda i: (i, 0))]
    if emit_stats:
        out_shapes += [jax.ShapeDtypeStruct((num_tiles, 1, out_dim), jnp.float32)] * 2
        out_specs += [pl.BlockSpec((1, 1, out_dim), lambda i: (i, 0, 0))] * 2

    in_bytes = inp.dtype.itemsize
    out_bytes = jnp.dtype(out_dtype).itemsize
    flops = 2 * n_pad * in_dim * out_dim
    bytes_accessed = (n_pad * in_dim * in_bytes
                      + in_dim * out_dim * 2
                      + n_pad * out_dim * out_bytes
                      + (2 * num_tiles * out_dim * 4 if emit_stats else 0))

    kernel = functools.partial(_layer_kernel, normalize_input, emit_stats, tm,
                               n_rows, has_pad_rows)
    return pl.pallas_call(
        kernel,
        out_shape=tuple(out_shapes),
        grid=(num_tiles,),
        in_specs=in_specs,
        out_specs=tuple(out_specs),
        compiler_params=pltpu.CompilerParams(
            dimension_semantics=("parallel",),
            vmem_limit_bytes=_vmem_limit_bytes(tm, in_dim, out_dim,
                                               in_bytes, out_bytes)),
        cost_estimate=pl.CostEstimate(flops=flops, transcendentals=0,
                                      bytes_accessed=bytes_accessed),
    )(*operands)


def prepare_params(params, num_layers):
    """One-time layout / dtype preparation (do NOT re-run per forward call):
      * hidden and output feature dims are zero-padded to a multiple of 128
        lanes so every kernel's output block is lane-dense (unmasked stores),
      * weights are pre-cast to bf16 (native MXU input dtype),
      * hidden Linear biases are dropped (exactly cancelled by the BN batch-
        mean subtraction),
      * gamma/beta are zero-padded so padded activation columns stay exactly 0,
      * the next layer's weight rows are zero-padded to match the padded input.
    Returns (hidden_layers, (w_last, b_last)) where hidden_layers is a list of
    (W_bf16, gamma, beta)."""
    if num_layers == 1:
        w, b = params
        o_pad = _round_up(w.shape[1], LANES)
        w_pad = jnp.pad(w, ((0, 0), (0, o_pad - w.shape[1]))).astype(jnp.bfloat16)
        b_pad = jnp.pad(b, ((0, 0), (0, o_pad - b.shape[1])))
        return [], (w_pad, b_pad)

    hidden = []
    idx = 0
    prev_row_pad = 0
    for _ in range(num_layers - 1):
        w, _b_unused, gamma, beta = params[idx:idx + 4]
        idx += 4
        hid = w.shape[1]
        hid_pad = _round_up(hid, LANES)
        w_pad = jnp.pad(w, ((0, prev_row_pad), (0, hid_pad - hid))).astype(jnp.bfloat16)
        gamma_pad = jnp.pad(gamma, ((0, 0), (0, hid_pad - hid)))   # pad with 0 -> s=0
        beta_pad = jnp.pad(beta, ((0, 0), (0, hid_pad - hid)))     # pad with 0 -> t=0
        hidden.append((w_pad, gamma_pad, beta_pad))
        prev_row_pad = hid_pad - hid

    w, b = params[idx], params[idx + 1]
    o_pad = _round_up(w.shape[1], LANES)
    w_last = jnp.pad(w, ((0, prev_row_pad), (0, o_pad - w.shape[1]))).astype(jnp.bfloat16)
    b_last = jnp.pad(b, ((0, 0), (0, o_pad - b.shape[1])))          # bias stays f32
    return hidden, (w_last, b_last)


def mlp_forward(x, prepared, output_dim, tile_rows=512):
    """Forward pass of the GIN MLP.  x: [N, input_dim] float32.
    `prepared` comes from prepare_params (padded, bf16 weights)."""
    n = x.shape[0]
    # Row tile: multiple of 16 sublanes (bf16 packing); once the batch is big
    # enough, split it into >=2 grid steps so both v7x TensorCores get work.
    tm = min(tile_rows, _round_up(n, 16))
    if n >= 32:
        tm = min(tm, _round_up(-(-n // 2), 16))
    n_pad = _round_up(n, tm)
    if n_pad != n:
        x = jnp.pad(x, ((0, n_pad - n), (0, 0)))

    hidden_layers, (w_last, b_last) = prepared

    if not hidden_layers:                       # num_layers == 1: linear model
        (out,) = _run_layer(x, w_last, None, None, b_last,
                            emit_stats=False, tm=tm, n_rows=n,
                            out_dtype=jnp.float32)
        return out[:n, :output_dim]

    z, s, t = x, None, None
    for (w, gamma, beta) in hidden_layers:
        # NOTE: the hidden-layer Linear bias is mathematically cancelled by the
        # BatchNorm batch-mean subtraction, so it is never loaded or added.
        z, psum, psumsq = _run_layer(z, w, s, t, None,
                                     emit_stats=True, tm=tm, n_rows=n,
                                     out_dtype=jnp.bfloat16)
        total = jnp.sum(psum, axis=0)            # (1, H_pad) f32
        total2 = jnp.sum(psumsq, axis=0)         # (1, H_pad) f32
        mean = total / n
        var = jnp.maximum(total2 / n - mean * mean, 0.0)   # biased variance
        s = gamma * jax.lax.rsqrt(var + BN_EPS)
        t = beta - mean * s

    (out,) = _run_layer(z, w_last, s, t, b_last,
                        emit_stats=False, tm=tm, n_rows=n,
                        out_dtype=jnp.float32)
    return out[:n, :output_dim]


def init_mlp_params(key, num_layers, input_dim, hidden_dim, output_dim):
    """Parameter init mimicking PyTorch defaults.
    nn.Linear: W, b ~ U(-1/sqrt(fan_in), 1/sqrt(fan_in)); BatchNorm1d: gamma=1,
    beta=0.  Weights stored as [in_dim, out_dim] (transpose of PyTorch),
    biases/gamma/beta as [1, dim]."""
    if num_layers < 1:
        raise ValueError("number of layers should be positive!")
    if num_layers == 1:
        dims = [(input_dim, output_dim)]
    else:
        dims = ([(input_dim, hidden_dim)]
                + [(hidden_dim, hidden_dim)] * (num_layers - 2)
                + [(hidden_dim, output_dim)])

    params = []
    for layer, (fan_in, fan_out) in enumerate(dims):
        kw, kb, key = jax.random.split(key, 3)
        bound = 1.0 / (fan_in ** 0.5)
        w = jax.random.uniform(kw, (fan_in, fan_out), jnp.float32, -bound, bound)
        b = jax.random.uniform(kb, (1, fan_out), jnp.float32, -bound, bound)
        params += [w, b]
        if layer < num_layers - 1:               # hidden layer -> BatchNorm1d
            params += [jnp.ones((1, fan_out), jnp.float32),
                       jnp.zeros((1, fan_out), jnp.float32)]
    return params


def mlp_reference(x, params, num_layers):
    """Pure-JAX reference mirroring the kernel math: bf16 MXU inputs, bf16
    inter-layer activation storage, f32 BN statistics from the f32 accumulator,
    folded scale/shift, biased variance, eps=1e-5, hidden biases dropped.
    (Differs from a pure-f32 torch MLP by bf16 rounding, ~1e-2 relative.)"""
    if num_layers == 1:
        w, b = params
        return jnp.dot(x.astype(jnp.bfloat16), w.astype(jnp.bfloat16),
                       preferred_element_type=jnp.float32) + b
    n = x.shape[0]
    h = x.astype(jnp.bfloat16)
    idx = 0
    for _ in range(num_layers - 1):
        w, _b, gamma, beta = params[idx:idx + 4]
        idx += 4
        z = jnp.dot(h, w.astype(jnp.bfloat16), preferred_element_type=jnp.float32)
        mean = jnp.sum(z, axis=0, keepdims=True) / n
        var = jnp.maximum(jnp.sum(z * z, axis=0, keepdims=True) / n - mean * mean, 0.0)
        s = gamma * jax.lax.rsqrt(var + BN_EPS)
        t = beta - mean * s
        zb = z.astype(jnp.bfloat16).astype(jnp.float32)   # kernel stores z as bf16
        h = jnp.maximum(zb * s + t, 0.0).astype(jnp.bfloat16)
    w, b = params[idx], params[idx + 1]
    return jnp.dot(h, w.astype(jnp.bfloat16), preferred_element_type=jnp.float32) + b


if __name__ == "__main__":
    # Small shapes consistent with the module: x is [num_nodes, input_dim].
    num_layers, input_dim, hidden_dim, output_dim = 3, 16, 32, 4
    batch = 8

    key = jax.random.PRNGKey(0)
    kx, kp = jax.random.split(key)
    x = jax.random.normal(kx, (batch, input_dim), jnp.float32)
    params = init_mlp_params(kp, num_layers, input_dim, hidden_dim, output_dim)

    # One-time layout/dtype prep: lane padding + bf16 weight cast happen here,
    # NOT inside the per-forward path.
    prepared = prepare_params(params, num_layers)

    fwd = jax.jit(functools.partial(mlp_forward, output_dim=output_dim))
    out = jax.block_until_ready(fwd(x, prepared))

    ref = mlp_reference(x, params, num_layers)
    assert out.shape == (batch, output_dim)
    assert jnp.allclose(out, ref, atol=1e-2, rtol=1e-2), "mismatch vs reference"

    print("KERNEL_OK")
</pallas_src>

<mosaic_0001>
module attributes {stable_mosaic.version = 11 : i64} {
  func.func @_layer_kernel(%arg0: i32, %arg1: memref<16x16xf32, #tpu.memory_space<vmem>>, %arg2: memref<16x128xbf16, #tpu.memory_space<vmem>>, %arg3: memref<16x128xbf16, #tpu.memory_space<vmem>>, %arg4: memref<1x1x128xf32, #tpu.memory_space<vmem>>, %arg5: memref<1x1x128xf32, #tpu.memory_space<vmem>>) attributes {dimension_semantics = [#tpu.dimension_semantics<parallel>], iteration_bounds = array<i64: 1>, scalar_prefetch = 0 : i64, scratch_operands = 0 : i64, tpu.core_type = #tpu.core_type<tc>, window_params = [{transform_indices = @transform_0, window_bounds = array<i64: 16, 16>}, {pipeline_mode = #tpu.pipeline_mode<synchronous>, transform_indices = @transform_1, window_bounds = array<i64: 16, 128>}, {transform_indices = @transform_2, window_bounds = array<i64: 16, 128>}, {transform_indices = @transform_3, window_bounds = array<i64: 1, 1, 128>}, {transform_indices = @transform_4, window_bounds = array<i64: 1, 1, 128>}]} {
    %c0 = arith.constant 0 : index
    %c0_0 = arith.constant 0 : index
    %0 = vector.load %arg1[%c0, %c0_0] : memref<16x16xf32, #tpu.memory_space<vmem>>, vector<16x16xf32>
    %1 = arith.truncf %0 : vector<16x16xf32> to vector<16x16xbf16>
    %c0_1 = arith.constant 0 : index
    %c0_2 = arith.constant 0 : index
    %2 = vector.load %arg2[%c0_1, %c0_2] : memref<16x128xbf16, #tpu.memory_space<vmem>>, vector<16x128xbf16>
    %cst = arith.constant dense<0.000000e+00> : vector<16x128xf32>
    %3 = tpu.matmul %1, %2, %cst {dimension_numbers = #tpu.dot_dimension_numbers<[1], [0], [0], [1], [0, 0, 1, 1], [], []>} : vector<16x16xbf16>, vector<16x128xbf16>, vector<16x128xf32> -> vector<16x128xf32>
    %4 = arith.truncf %3 : vector<16x128xf32> to vector<16x128xbf16>
    %c0_3 = arith.constant 0 : index
    %c0_4 = arith.constant 0 : index
    %5 = vector.load %arg3[%c0_3, %c0_4] : memref<16x128xbf16, #tpu.memory_space<vmem>>, vector<16x128xbf16>
    tpu.vector_store %arg3[%c0_3, %c0_4], %4 {strides = array<i32>} : memref<16x128xbf16, #tpu.memory_space<vmem>>, vector<16x128xbf16>,
    %c0_i32 = arith.constant 0 : i32
    %6 = arith.cmpi eq, %arg0, %c0_i32 : i32
    %7 = arith.extui %6 : i1 to i32
    %c0_i32_5 = arith.constant 0 : i32
    %8 = arith.cmpi ne, %7, %c0_i32_5 : i32
    scf.if %8 {
      %c16_i32 = arith.constant 16 : i32
      %12 = arith.muli %arg0, %c16_i32 : i32
      %13 = tpu.iota {dimensions = array<i32: 0>} : vector<16x128xi32>
      %14 = vector.broadcast %12 : i32 to vector<16x128xi32>
      %15 = arith.addi %14, %13 : vector<16x128xi32>
      %c8_i32 = arith.constant 8 : i32
      %16 = vector.broadcast %c8_i32 : i32 to vector<16x128xi32>
      %17 = arith.cmpi slt, %15, %16 : vector<16x128xi32>
      %18 = arith.extui %17 : vector<16x128xi1> to vector<16x128xi32>
      %19 = arith.sitofp %18 : vector<16x128xi32> to vector<16x128xf32>
      %20 = arith.mulf %3, %19 : vector<16x128xf32>
      %cst_7 = arith.constant dense<0.000000e+00> : vector<128xf32>
      %21 = vector.multi_reduction <add>, %20, %cst_7 [0] : vector<16x128xf32> to vector<128xf32>
      %22 = vector.shape_cast %21 : vector<128xf32> to vector<1x128xf32>
      %23 = vector.shape_cast %22 : vector<1x128xf32> to vector<1x1x128xf32>
      %c0_8 = arith.constant 0 : index
      %c0_9 = arith.constant 0 : index
      %c0_10 = arith.constant 0 : index
      %24 = vector.load %arg4[%c0_8, %c0_9, %c0_10] : memref<1x1x128xf32, #tpu.memory_space<vmem>>, vector<1x1x128xf32>
      tpu.vector_store %arg4[%c0_8, %c0_9, %c0_10], %23 {strides = array<i32>} : memref<1x1x128xf32, #tpu.memory_space<vmem>>, vector<1x1x128xf32>,
      %25 = arith.mulf %20, %3 : vector<16x128xf32>
      %cst_11 = arith.constant dense<0.000000e+00> : vector<128xf32>
      %26 = vector.multi_reduction <add>, %25, %cst_11 [0] : vector<16x128xf32> to vector<128xf32>
      %27 = vector.shape_cast %26 : vector<128xf32> to vector<1x128xf32>
      %28 = vector.shape_cast %27 : vector<1x128xf32> to vector<1x1x128xf32>
      %c0_12 = arith.constant 0 : index
      %c0_13 = arith.constant 0 : index
      %c0_14 = arith.constant 0 : index
      %29 = vector.load %arg5[%c0_12, %c0_13, %c0_14] : memref<1x1x128xf32, #tpu.memory_space<vmem>>, vector<1x1x128xf32>
      tpu.vector_store %arg5[%c0_12, %c0_13, %c0_14], %28 {strides = array<i32>} : memref<1x1x128xf32, #tpu.memory_space<vmem>>, vector<1x1x128xf32>,
    } else {
    }
    %true = arith.constant true
    %9 = arith.xori %6, %true : i1
    %10 = arith.extui %9 : i1 to i32
    %c0_i32_6 = arith.constant 0 : i32
    %11 = arith.cmpi ne, %10, %c0_i32_6 : i32
    scf.if %11 {
      %cst_7 = arith.constant dense<0.000000e+00> : vector<128xf32>
      %12 = vector.multi_reduction <add>, %3, %cst_7 [0] : vector<16x128xf32> to vector<128xf32>
      %13 = vector.shape_cast %12 : vector<128xf32> to vector<1x128xf32>
      %14 = vector.shape_cast %13 : vector<1x128xf32> to vector<1x1x128xf32>
      %c0_8 = arith.constant 0 : index
      %c0_9 = arith.constant 0 : index
      %c0_10 = arith.constant 0 : index
      %15 = vector.load %arg4[%c0_8, %c0_9, %c0_10] : memref<1x1x128xf32, #tpu.memory_space<vmem>>, vector<1x1x128xf32>
      tpu.vector_store %arg4[%c0_8, %c0_9, %c0_10], %14 {strides = array<i32>} : memref<1x1x128xf32, #tpu.memory_space<vmem>>, vector<1x1x128xf32>,
      %16 = arith.mulf %3, %3 : vector<16x128xf32>
      %cst_11 = arith.constant dense<0.000000e+00> : vector<128xf32>
      %17 = vector.multi_reduction <add>, %16, %cst_11 [0] : vector<16x128xf32> to vector<128xf32>
      %18 = vector.shape_cast %17 : vector<128xf32> to vector<1x128xf32>
      %19 = vector.shape_cast %18 : vector<1x128xf32> to vector<1x1x128xf32>
      %c0_12 = arith.constant 0 : index
      %c0_13 = arith.constant 0 : index
      %c0_14 = arith.constant 0 : index
      %20 = vector.load %arg5[%c0_12, %c0_13, %c0_14] : memref<1x1x128xf32, #tpu.memory_space<vmem>>, vector<1x1x128xf32>
      tpu.vector_store %arg5[%c0_12, %c0_13, %c0_14], %19 {strides = array<i32>} : memref<1x1x128xf32, #tpu.memory_space<vmem>>, vector<1x1x128xf32>,
    } else {
    }
    return
  }
  func.func @transform_0(%arg0: i32) -> (i32, i32) {
    %c0_i32 = arith.constant 0 : i32
    %c0_i32_0 = arith.constant 0 : i32
    return %arg0, %c0_i32 : i32, i32
  }
  func.func @transform_1(%arg0: i32) -> (i32, i32) {
    %c0_i32 = arith.constant 0 : i32
    %c0_i32_0 = arith.constant 0 : i32
    %c0_i32_1 = arith.constant 0 : i32
    return %c0_i32, %c0_i32_0 : i32, i32
  }
  func.func @transform_2(%arg0: i32) -> (i32, i32) {
    %c0_i32 = arith.constant 0 : i32
    %c0_i32_0 = arith.constant 0 : i32
    return %arg0, %c0_i32 : i32, i32
  }
  func.func @transform_3(%arg0: i32) -> (i32, i32, i32) {
    %c0_i32 = arith.constant 0 : i32
    %c0_i32_0 = arith.constant 0 : i32
    %c0_i32_1 = arith.constant 0 : i32
    return %arg0, %c0_i32, %c0_i32_0 : i32, i32, i32
  }
  func.func @transform_4(%arg0: i32) -> (i32, i32, i32) {
    %c0_i32 = arith.constant 0 : i32
    %c0_i32_0 = arith.constant 0 : i32
    %c0_i32_1 = arith.constant 0 : i32
    return %arg0, %c0_i32, %c0_i32_0 : i32, i32, i32
  }
}

module attributes {stable_mosaic.version = 11 : i64} {
  func.func @_layer_kernel(%arg0: i32, %arg1: memref<16x128xbf16, #tpu.memory_space<vmem>>, %arg2: memref<1x128xf32, #tpu.memory_space<vmem>>, %arg3: memref<1x128xf32, #tpu.memory_space<vmem>>, %arg4: memref<128x128xbf16, #tpu.memory_space<vmem>>, %arg5: memref<16x128xbf16, #tpu.memory_space<vmem>>, %arg6: memref<1x1x128xf32, #tpu.memory_space<vmem>>, %arg7: memref<1x1x128xf32, #tpu.memory_space<vmem>>) attributes {dimension_semantics = [#tpu.dimension_semantics<parallel>], iteration_bounds = array<i64: 1>, scalar_prefetch = 0 : i64, scratch_operands = 0 : i64, tpu.core_type = #tpu.core_type<tc>, window_params = [{transform_indices = @transform_0, window_bounds = array<i64: 16, 128>}, {pipeline_mode = #tpu.pipeline_mode<synchronous>, transform_indices = @transform_1, window_bounds = array<i64: 1, 128>}, {pipeline_mode = #tpu.pipeline_mode<synchronous>, transform_indices = @transform_2, window_bounds = array<i64: 1, 128>}, {pipeline_mode = #tpu.pipeline_mode<synchronous>, transform_indices = @transform_3, window_bounds = array<i64: 128, 128>}, {transform_indices = @transform_4, window_bounds = array<i64: 16, 128>}, {transform_indices = @transform_5, window_bounds = array<i64: 1, 1, 128>}, {transform_indices = @transform_6, window_bounds = array<i64: 1, 1, 128>}]} {
    %c0 = arith.constant 0 : index
    %c0_0 = arith.constant 0 : index
    %0 = vector.load %arg1[%c0, %c0_0] : memref<16x128xbf16, #tpu.memory_space<vmem>>, vector<16x128xbf16>
    %1 = arith.extf %0 : vector<16x128xbf16> to vector<16x128xf32>
    %c0_1 = arith.constant 0 : index
    %c0_2 = arith.constant 0 : index
    %2 = vector.load %arg2[%c0_1, %c0_2] : memref<1x128xf32, #tpu.memory_space<vmem>>, vector<1x128xf32>
    %3 = vector.broadcast %2 : vector<1x128xf32> to vector<16x128xf32>
    %4 = arith.mulf %1, %3 : vector<16x128xf32>
    %c0_3 = arith.constant 0 : index
    %c0_4 = arith.constant 0 : index
    %5 = vector.load %arg3[%c0_3, %c0_4] : memref<1x128xf32, #tpu.memory_space<vmem>>, vector<1x128xf32>
    %6 = vector.broadcast %5 : vector<1x128xf32> to vector<16x128xf32>
    %7 = arith.addf %4, %6 : vector<16x128xf32>
    %cst = arith.constant 0.000000e+00 : f32
    %8 = vector.broadcast %cst : f32 to vector<16x128xf32>
    %9 = arith.maximumf %7, %8 : vector<16x128xf32>
    %10 = arith.truncf %9 : vector<16x128xf32> to vector<16x128xbf16>
    %c0_5 = arith.constant 0 : index
    %c0_6 = arith.constant 0 : index
    %11 = vector.load %arg4[%c0_5, %c0_6] : memref<128x128xbf16, #tpu.memory_space<vmem>>, vector<128x128xbf16>
    %cst_7 = arith.constant dense<0.000000e+00> : vector<16x128xf32>
    %12 = tpu.matmul %10, %11, %cst_7 {dimension_numbers = #tpu.dot_dimension_numbers<[1], [0], [0], [1], [0, 0, 1, 1], [], []>} : vector<16x128xbf16>, vector<128x128xbf16>, vector<16x128xf32> -> vector<16x128xf32>
    %13 = arith.truncf %12 : vector<16x128xf32> to vector<16x128xbf16>
    %c0_8 = arith.constant 0 : index
    %c0_9 = arith.constant 0 : index
    %14 = vector.load %arg5[%c0_8, %c0_9] : memref<16x128xbf16, #tpu.memory_space<vmem>>, vector<16x128xbf16>
    tpu.vector_store %arg5[%c0_8, %c0_9], %13 {strides = array<i32>} : memref<16x128xbf16, #tpu.memory_space<vmem>>, vector<16x128xbf16>,
    %c0_i32 = arith.constant 0 : i32
    %15 = arith.cmpi eq, %arg0, %c0_i32 : i32
    %16 = arith.extui %15 : i1 to i32
    %c0_i32_10 = arith.constant 0 : i32
    %17 = arith.cmpi ne, %16, %c0_i32_10 : i32
    scf.if %17 {
      %c16_i32 = arith.constant 16 : i32
      %21 = arith.muli %arg0, %c16_i32 : i32
      %22 = tpu.iota {dimensions = array<i32: 0>} : vector<16x128xi32>
      %23 = vector.broadcast %21 : i32 to vector<16x128xi32>
      %24 = arith.addi %23, %22 : vector<16x128xi32>
      %c8_i32 = arith.constant 8 : i32
      %25 = vector.broadcast %c8_i32 : i32 to vector<16x128xi32>
      %26 = arith.cmpi slt, %24, %25 : vector<16x128xi32>
      %27 = arith.extui %26 : vector<16x128xi1> to vector<16x128xi32>
      %28 = arith.sitofp %27 : vector<16x128xi32> to vector<16x128xf32>
      %29 = arith.mulf %12, %28 : vector<16x128xf32>
      %cst_12 = arith.constant dense<0.000000e+00> : vector<128xf32>
      %30 = vector.multi_reduction <add>, %29, %cst_12 [0] : vector<16x128xf32> to vector<128xf32>
      %31 = vector.shape_cast %30 : vector<128xf32> to vector<1x128xf32>
      %32 = vector.shape_cast %31 : vector<1x128xf32> to vector<1x1x128xf32>
      %c0_13 = arith.constant 0 : index
      %c0_14 = arith.constant 0 : index
      %c0_15 = arith.constant 0 : index
      %33 = vector.load %arg6[%c0_13, %c0_14, %c0_15] : memref<1x1x128xf32, #tpu.memory_space<vmem>>, vector<1x1x128xf32>
      tpu.vector_store %arg6[%c0_13, %c0_14, %c0_15], %32 {strides = array<i32>} : memref<1x1x128xf32, #tpu.memory_space<vmem>>, vector<1x1x128xf32>,
      %34 = arith.mulf %29, %12 : vector<16x128xf32>
      %cst_16 = arith.constant dense<0.000000e+00> : vector<128xf32>
      %35 = vector.multi_reduction <add>, %34, %cst_16 [0] : vector<16x128xf32> to vector<128xf32>
      %36 = vector.shape_cast %35 : vector<128xf32> to vector<1x128xf32>
      %37 = vector.shape_cast %36 : vector<1x128xf32> to vector<1x1x128xf32>
      %c0_17 = arith.constant 0 : index
      %c0_18 = arith.constant 0 : index
      %c0_19 = arith.constant 0 : index
      %38 = vector.load %arg7[%c0_17, %c0_18, %c0_19] : memref<1x1x128xf32, #tpu.memory_space<vmem>>, vector<1x1x128xf32>
      tpu.vector_store %arg7[%c0_17, %c0_18, %c0_19], %37 {strides = array<i32>} : memref<1x1x128xf32, #tpu.memory_space<vmem>>, vector<1x1x128xf32>,
    } else {
    }
    %true = arith.constant true
    %18 = arith.xori %15, %true : i1
    %19 = arith.extui %18 : i1 to i32
    %c0_i32_11 = arith.constant 0 : i32
    %20 = arith.cmpi ne, %19, %c0_i32_11 : i32
    scf.if %20 {
      %cst_12 = arith.constant dense<0.000000e+00> : vector<128xf32>
      %21 = vector.multi_reduction <add>, %12, %cst_12 [0] : vector<16x128xf32> to vector<128xf32>
      %22 = vector.shape_cast %21 : vector<128xf32> to vector<1x128xf32>
      %23 = vector.shape_cast %22 : vector<1x128xf32> to vector<1x1x128xf32>
      %c0_13 = arith.constant 0 : index
      %c0_14 = arith.constant 0 : index
      %c0_15 = arith.constant 0 : index
      %24 = vector.load %arg6[%c0_13, %c0_14, %c0_15] : memref<1x1x128xf32, #tpu.memory_space<vmem>>, vector<1x1x128xf32>
      tpu.vector_store %arg6[%c0_13, %c0_14, %c0_15], %23 {strides = array<i32>} : memref<1x1x128xf32, #tpu.memory_space<vmem>>, vector<1x1x128xf32>,
      %25 = arith.mulf %12, %12 : vector<16x128xf32>
      %cst_16 = arith.constant dense<0.000000e+00> : vector<128xf32>
      %26 = vector.multi_reduction <add>, %25, %cst_16 [0] : vector<16x128xf32> to vector<128xf32>
      %27 = vector.shape_cast %26 : vector<128xf32> to vector<1x128xf32>
      %28 = vector.shape_cast %27 : vector<1x128xf32> to vector<1x1x128xf32>
      %c0_17 = arith.constant 0 : index
      %c0_18 = arith.constant 0 : index
      %c0_19 = arith.constant 0 : index
      %29 = vector.load %arg7[%c0_17, %c0_18, %c0_19] : memref<1x1x128xf32, #tpu.memory_space<vmem>>, vector<1x1x128xf32>
      tpu.vector_store %arg7[%c0_17, %c0_18, %c0_19], %28 {strides = array<i32>} : memref<1x1x128xf32, #tpu.memory_space<vmem>>, vector<1x1x128xf32>,
    } else {
    }
    return
  }
  func.func @transform_0(%arg0: i32) -> (i32, i32) {
    %c0_i32 = arith.constant 0 : i32
    %c0_i32_0 = arith.constant 0 : i32
    return %arg0, %c0_i32 : i32, i32
  }
  func.func @transform_1(%arg0: i32) -> (i32, i32) {
    %c0_i32 = arith.constant 0 : i32
    %c0_i32_0 = arith.constant 0 : i32
    %c0_i32_1 = arith.constant 0 : i32
    return %c0_i32, %c0_i32_0 : i32, i32
  }
  func.func @transform_2(%arg0: i32) -> (i32, i32) {
    %c0_i32 = arith.constant 0 : i32
    %c0_i32_0 = arith.constant 0 : i32
    %c0_i32_1 = arith.constant 0 : i32
    return %c0_i32, %c0_i32_0 : i32, i32
  }
  func.func @transform_3(%arg0: i32) -> (i32, i32) {
    %c0_i32 = arith.constant 0 : i32
    %c0_i32_0 = arith.constant 0 : i32
    %c0_i32_1 = arith.constant 0 : i32
    return %c0_i32, %c0_i32_0 : i32, i32
  }
  func.func @transform_4(%arg0: i32) -> (i32, i32) {
    %c0_i32 = arith.constant 0 : i32
    %c0_i32_0 = arith.constant 0 : i32
    return %arg0, %c0_i32 : i32, i32
  }
  func.func @transform_5(%arg0: i32) -> (i32, i32, i32) {
    %c0_i32 = arith.constant 0 : i32
    %c0_i32_0 = arith.constant 0 : i32
    %c0_i32_1 = arith.constant 0 : i32
    return %arg0, %c0_i32, %c0_i32_0 : i32, i32, i32
  }
  func.func @transform_6(%arg0: i32) -> (i32, i32, i32) {
    %c0_i32 = arith.constant 0 : i32
    %c0_i32_0 = arith.constant 0 : i32
    %c0_i32_1 = arith.constant 0 : i32
    return %arg0, %c0_i32, %c0_i32_0 : i32, i32, i32
  }
}

module attributes {stable_mosaic.version = 11 : i64} {
  func.func @_layer_kernel(%arg0: i32, %arg1: memref<16x128xbf16, #tpu.memory_space<vmem>>, %arg2: memref<1x128xf32, #tpu.memory_space<vmem>>, %arg3: memref<1x128xf32, #tpu.memory_space<vmem>>, %arg4: memref<128x128xbf16, #tpu.memory_space<vmem>>, %arg5: memref<1x128xf32, #tpu.memory_space<vmem>>, %arg6: memref<16x128xf32, #tpu.memory_space<vmem>>) attributes {dimension_semantics = [#tpu.dimension_semantics<parallel>], iteration_bounds = array<i64: 1>, scalar_prefetch = 0 : i64, scratch_operands = 0 : i64, tpu.core_type = #tpu.core_type<tc>, window_params = [{transform_indices = @transform_0, window_bounds = array<i64: 16, 128>}, {pipeline_mode = #tpu.pipeline_mode<synchronous>, transform_indices = @transform_1, window_bounds = array<i64: 1, 128>}, {pipeline_mode = #tpu.pipeline_mode<synchronous>, transform_indices = @transform_2, window_bounds = array<i64: 1, 128>}, {pipeline_mode = #tpu.pipeline_mode<synchronous>, transform_indices = @transform_3, window_bounds = array<i64: 128, 128>}, {pipeline_mode = #tpu.pipeline_mode<synchronous>, transform_indices = @transform_4, window_bounds = array<i64: 1, 128>}, {transform_indices = @transform_5, window_bounds = array<i64: 16, 128>}]} {
    %c0 = arith.constant 0 : index
    %c0_0 = arith.constant 0 : index
    %0 = vector.load %arg1[%c0, %c0_0] : memref<16x128xbf16, #tpu.memory_space<vmem>>, vector<16x128xbf16>
    %1 = arith.extf %0 : vector<16x128xbf16> to vector<16x128xf32>
    %c0_1 = arith.constant 0 : index
    %c0_2 = arith.constant 0 : index
    %2 = vector.load %arg2[%c0_1, %c0_2] : memref<1x128xf32, #tpu.memory_space<vmem>>, vector<1x128xf32>
    %3 = vector.broadcast %2 : vector<1x128xf32> to vector<16x128xf32>
    %4 = arith.mulf %1, %3 : vector<16x128xf32>
    %c0_3 = arith.constant 0 : index
    %c0_4 = arith.constant 0 : index
    %5 = vector.load %arg3[%c0_3, %c0_4] : memref<1x128xf32, #tpu.memory_space<vmem>>, vector<1x128xf32>
    %6 = vector.broadcast %5 : vector<1x128xf32> to vector<16x128xf32>
    %7 = arith.addf %4, %6 : vector<16x128xf32>
    %cst = arith.constant 0.000000e+00 : f32
    %8 = vector.broadcast %cst : f32 to vector<16x128xf32>
    %9 = arith.maximumf %7, %8 : vector<16x128xf32>
    %10 = arith.truncf %9 : vector<16x128xf32> to vector<16x128xbf16>
    %c0_5 = arith.constant 0 : index
    %c0_6 = arith.constant 0 : index
    %11 = vector.load %arg4[%c0_5, %c0_6] : memref<128x128xbf16, #tpu.memory_space<vmem>>, vector<128x128xbf16>
    %cst_7 = arith.constant dense<0.000000e+00> : vector<16x128xf32>
    %12 = tpu.matmul %10, %11, %cst_7 {dimension_numbers = #tpu.dot_dimension_numbers<[1], [0], [0], [1], [0, 0, 1, 1], [], []>} : vector<16x128xbf16>, vector<128x128xbf16>, vector<16x128xf32> -> vector<16x128xf32>
    %c0_8 = arith.constant 0 : index
    %c0_9 = arith.constant 0 : index
    %13 = vector.load %arg5[%c0_8, %c0_9] : memref<1x128xf32, #tpu.memory_space<vmem>>, vector<1x128xf32>
    %14 = vector.broadcast %13 : vector<1x128xf32> to vector<16x128xf32>
    %15 = arith.addf %12, %14 : vector<16x128xf32>
    %c0_10 = arith.constant 0 : index
    %c0_11 = arith.constant 0 : index
    %16 = vector.load %arg6[%c0_10, %c0_11] : memref<16x128xf32, #tpu.memory_space<vmem>>, vector<16x128xf32>
    tpu.vector_store %arg6[%c0_10, %c0_11], %15 {strides = array<i32>} : memref<16x128xf32, #tpu.memory_space<vmem>>, vector<16x128xf32>,
    return
  }
  func.func @transform_0(%arg0: i32) -> (i32, i32) {
    %c0_i32 = arith.constant 0 : i32
    %c0_i32_0 = arith.constant 0 : i32
    return %arg0, %c0_i32 : i32, i32
  }
  func.func @transform_1(%arg0: i32) -> (i32, i32) {
    %c0_i32 = arith.constant 0 : i32
    %c0_i32_0 = arith.constant 0 : i32
    %c0_i32_1 = arith.constant 0 : i32
    return %c0_i32, %c0_i32_0 : i32, i32
  }
  func.func @transform_2(%arg0: i32) -> (i32, i32) {
    %c0_i32 = arith.constant 0 : i32
    %c0_i32_0 = arith.constant 0 : i32
    %c0_i32_1 = arith.constant 0 : i32
    return %c0_i32, %c0_i32_0 : i32, i32
  }
  func.func @transform_3(%arg0: i32) -> (i32, i32) {
    %c0_i32 = arith.constant 0 : i32
    %c0_i32_0 = arith.constant 0 : i32
    %c0_i32_1 = arith.constant 0 : i32
    return %c0_i32, %c0_i32_0 : i32, i32
  }
  func.func @transform_4(%arg0: i32) -> (i32, i32) {
    %c0_i32 = arith.constant 0 : i32
    %c0_i32_0 = arith.constant 0 : i32
    %c0_i32_1 = arith.constant 0 : i32
    return %c0_i32, %c0_i32_0 : i32, i32
  }
  func.func @transform_5(%arg0: i32) -> (i32, i32) {
    %c0_i32 = arith.constant 0 : i32
    %c0_i32_0 = arith.constant 0 : i32
    return %arg0, %c0_i32 : i32, i32
  }
}

</mosaic_0001>

<llo_original>
// kernel: mlp_forward.4
$region0: #{mlp_forward.4}
  #allocation0 [shape = 'u32[]', space=smem, size = 0x4, offset = 0x4, fixed_abs, tag = 'smem constant byte address 0x4 - core index']
  #allocation1 [shape = 'u32[144,128]{1,0:T(1,128)}', space=vmem, size = 0x12000, scoped, tag = 'internal scratch']
  %s0 = inlined_call_operand.vmem [shape: bf16[16,128], index: 0, kind: input, shape index: {}]
  %s1 = inlined_call_operand.vmem [shape: f32[1,128], index: 1, kind: input, shape index: {}]
  %s2 = inlined_call_operand.vmem [shape: f32[1,128], index: 2, kind: input, shape index: {}]
  %s3 = inlined_call_operand.vmem [shape: bf16[128,128], index: 3, kind: input, shape index: {}]
  %s4 = inlined_call_operand.vmem [shape: bf16[16,128], index: 4, kind: output, shape index: {0}]
  %s5 = inlined_call_operand.vmem [shape: f32[1,1,128], index: 5, kind: output, shape index: {1}]
  %s6 = inlined_call_operand.vmem [shape: f32[1,1,128], index: 6, kind: output, shape index: {2}]
  %7 = xla_tuple %s4, %s5, %s6
  %s8 = sld [smem:[#allocation0]]
  $region50: #{mlp_forward.4} parent=0
    _
  %s10 = ssub.s32 1, %s8
  %s11 = scalar_select 0, %s10, %s8
  // Predicated region
  $region2: #{mlp_forward.4} parent=0 // pred_check
    _
  $region3: #{mlp_forward.4} parent=0 // pred_check_branch
    %13 = sbr.rel (0) target = $region5
  $region4: #{mlp_forward.4} parent=0 // pred_region
    _
  $region5: #{mlp_forward.4} parent=0 // pred_fallthru
    _
  // Predicated region
  $region6: #{mlp_forward.4} parent=0 // pred_check
    _
  $region7: #{mlp_forward.4} parent=0 // pred_check_branch
    %15 = sbr.rel (0) target = $region9
  $region8: #{mlp_forward.4} parent=0 // pred_region
    _
  $region9: #{mlp_forward.4} parent=0 // pred_fallthru
    _
  // Predicated region
  $region10: #{mlp_forward.4} parent=0 // pred_check
    _
  $region11: #{mlp_forward.4} parent=0 // pred_check_branch
    %17 = sbr.rel (0) target = $region13
  $region12: #{mlp_forward.4} parent=0 // pred_region
    _
  $region13: #{mlp_forward.4} parent=0 // pred_fallthru
    _
  // Predicated region
  $region14: #{mlp_forward.4} parent=0 // pred_check
    _
  $region15: #{mlp_forward.4} parent=0 // pred_check_branch
    %19 = sbr.rel (0) target = $region17
  $region16: #{mlp_forward.4} parent=0 // pred_region
    _
  $region17: #{mlp_forward.4} parent=0 // pred_fallthru
    _
  %v21 = vld [vmem:[%s0] sm:$0xf]
  %v22 = vld [vmem:[%s0 + $0x4] sm:$0xf]
  %v23 = vunpack.c.l.bf16 %v21
  %v24 = vunpack.c.l.bf16 %v22
  %v25 = vld [vmem:[%s1] sm:$0x1]
  %v27 = vlaneseq
  %v28 = vshrl.u32 %v27, 7
  %v29 = vsub.s32 0, %v28
  %v30 = vrot.slane %v25, %v29
  %v32 = vmul.f32 %v23, %v30
  %v33 = vmul.f32 %v24, %v30
  %v34 = vld [vmem:[%s2] sm:$0x1]
  %v36 = vlaneseq
  %v37 = vshrl.u32 %v36, 7
  %v38 = vsub.s32 0, %v37
  %v39 = vrot.slane %v34, %v38
  %v41 = vadd.f32 %v32, %v39
  %v42 = vadd.f32 %v33, %v39
  %v43 = vmax.f32 %v41, 0.0
  %v44 = vmax.f32 %v42, 0.0
  %v45 = vpack.c.bf16 %v44, %v43
  %v46 = vld [vmem:[%s3] sm:$0xf]
  %v47 = vld [vmem:[%s3 + $0x4] sm:$0xf]
  %v48 = vld [vmem:[%s3 + $0x8] sm:$0xf]
  %v49 = vld [vmem:[%s3 + $0xc] sm:$0xf]
  %v50 = vld [vmem:[%s3 + $0x10] sm:$0xf]
  %v51 = vld [vmem:[%s3 + $0x14] sm:$0xf]
  %v52 = vld [vmem:[%s3 + $0x18] sm:$0xf]
  %v53 = vld [vmem:[%s3 + $0x1c] sm:$0xf]
  %v54 = vld [vmem:[%s3 + $0x20] sm:$0xf]
  %v55 = vld [vmem:[%s3 + $0x24] sm:$0xf]
  %v56 = vld [vmem:[%s3 + $0x28] sm:$0xf]
  %v57 = vld [vmem:[%s3 + $0x2c] sm:$0xf]
  %v58 = vld [vmem:[%s3 + $0x30] sm:$0xf]
  %v59 = vld [vmem:[%s3 + $0x34] sm:$0xf]
  %v60 = vld [vmem:[%s3 + $0x38] sm:$0xf]
  %v61 = vld [vmem:[%s3 + $0x3c] sm:$0xf]
  %v78 = vunpack.c.l.b16 %v46
  %v79 = vunpack.c.l.b16 %v47
  %v80 = vunpack.c.l.b16 %v48
  %v81 = vunpack.c.l.b16 %v49
  %v82 = vunpack.c.l.b16 %v50
  %v83 = vunpack.c.l.b16 %v51
  %v84 = vunpack.c.l.b16 %v52
  %v85 = vunpack.c.l.b16 %v53
  %v86 = vunpack.c.l.b16 %v54
  %v87 = vunpack.c.l.b16 %v55
  %v88 = vunpack.c.l.b16 %v56
  %v89 = vunpack.c.l.b16 %v57
  %v90 = vunpack.c.l.b16 %v58
  %v91 = vunpack.c.l.b16 %v59
  %v92 = vunpack.c.l.b16 %v60
  %v93 = vunpack.c.l.b16 %v61
  %v94 = vpack.c.b16 %v79, %v78
  %v95 = vpack.c.b16 %v81, %v80
  %v96 = vpack.c.b16 %v83, %v82
  %v97 = vpack.c.b16 %v85, %v84
  %v98 = vpack.c.b16 %v87, %v86
  %v99 = vpack.c.b16 %v89, %v88
  %v100 = vpack.c.b16 %v91, %v90
  %v101 = vpack.c.b16 %v93, %v92
  %110 = vmatprep.subr.bf16.mxu0 0
  %111 = vmatpush1.bf16.msra.mxu0 %v101
  %112 = vmatprep.subr.bf16.mxu0 0
  %113 = vmatpush1.bf16.msra.mxu0 %v100
  %114 = vmatprep.subr.bf16.mxu0 0
  %115 = vmatpush1.bf16.msra.mxu0 %v99
  %116 = vmatprep.subr.bf16.mxu0 0
  %117 = vmatpush1.bf16.msra.mxu0 %v98
  %118 = vmatprep.subr.bf16.mxu0 0
  %119 = vmatpush1.bf16.msra.mxu0 %v97
  %120 = vmatprep.subr.bf16.mxu0 0
  %121 = vmatpush1.bf16.msra.mxu0 %v96
  %122 = vmatprep.subr.bf16.mxu0 0
  %123 = vmatpush1.bf16.msra.mxu0 %v95
  %124 = vmatprep.subr.bf16.mxu0 0
  %125 = vmatpush1.bf16.msra.mxu0 %v94
  %126 = vmatprep.subr.bf16.mxu0 0
  %127 = vmatpush2.bf16.msra.mxu0 0
  %128 = vmatprep.subr.bf16.mxu0 0
  %129 = vmatpush2.bf16.msra.mxu0 0
  %130 = vmatprep.subr.bf16.mxu0 0
  %131 = vmatpush2.bf16.msra.mxu0 0
  %132 = vmatprep.subr.bf16.mxu0 0
  %133 = vmatpush2.bf16.msra.mxu0 0
  %134 = vmatprep.subr.bf16.mxu0 0
  %135 = vmatpush2.bf16.msra.mxu0 0
  %136 = vmatprep.subr.bf16.mxu0 0
  %137 = vmatpush2.bf16.msra.mxu0 0
  %138 = vmatprep.subr.bf16.mxu0 0
  %139 = vmatpush2.bf16.msra.mxu0 0
  %140 = vmatprep.subr.bf16.mxu0 0
  %141 = vmatpush2.bf16.msra.mxu0 0
  %142 = vmatprep.mubr.bf16.mxu0 0
  %143 = vmatmul.mubr.bf16.gmra.mxu0 %v45
  %v144 = vpop.f32.mrf.mxu0
  %v145 = vadd.f32 0.0, %v144
  %v146 = vpop.f32.mrf.mxu0
  %v147 = vpop.f32.mrf.mxu0
  %v148 = vadd.f32 0.0, %v147
  %v149 = vpop.f32.mrf.mxu0
  %150 = vdwg.mxu0
  %v151 = vpack.c.bf16 %v148, %v145
  %v153 = vunpack.c.l.b16 %v151
  %v154 = vunpack.c.h.b16 %v151
  %v155 = vpack.c.b16 %v153, %v153
  %v156 = vpack.c.b16 %v154, %v154
  %159 = vst [vmem:[%s4] sm:$0xf] %v155
  %160 = vst [vmem:[%s4 + $0x4] sm:$0xf] %v156
  %p161 = scmp.eq.s32.totalorder 0, 0
  // Predicated region
  $region18: #{mlp_forward.4} parent=0 // pred_check
    %p162 = pneg %p161
  $region19: #{mlp_forward.4} parent=0 // pred_check_branch
    %164 = sbr.rel (%p162) target = $region21
  $region20: #{mlp_forward.4} parent=0 // pred_region
    %s165 = smul.u32 0, 16
    %v166 = vlaneseq
    %v167 = vshrl.u32 %v166, 7
    %v168 = vadd.s32 %v167, 8
    %v169 = vstv %s165
    %v170 = vadd.s32 %v169, %v167
    %v171 = vadd.s32 %v169, %v168
    %vm172 = vcmp.lt.s32.totalorder %v170, 8
    %vm173 = vcmp.lt.s32.totalorder %v171, 8
    %v174 = vsel %vm172, 1, 0
    %v175 = vsel %vm173, 1, 0
    %v176 = vcvt.s32.f32 %v174
    %v177 = vcvt.s32.f32 %v175
    %v178 = vmul.f32 %v145, %v176
    %v179 = vmul.f32 %v148, %v177
    %v180 = vadd.f32 %v178, %v179
    %v181 = vrot.slane %v180, 4
    %v182 = vadd.f32 %v180, %v181
    %v183 = vrot.slane %v182, 2
    %v184 = vadd.f32 %v182, %v183
    %v185 = vrot.slane %v184, 1
    %v186 = vadd.f32 %v184, %v185
    %187 = vst [vmem:[%s5] sm:$0x1] %v186
    %v188 = vmul.f32 %v178, %v145
    %v189 = vmul.f32 %v179, %v148
    %v190 = vadd.f32 %v188, %v189
    %v191 = vrot.slane %v190, 4
    %v192 = vadd.f32 %v190, %v191
    %v193 = vrot.slane %v192, 2
    %v194 = vadd.f32 %v192, %v193
    %v195 = vrot.slane %v194, 1
    %v196 = vadd.f32 %v194, %v195
    %197 = vst [vmem:[%s6] sm:$0x1] %v196
  $region21: #{mlp_forward.4} parent=0 // pred_fallthru
    _
  %p198 = scmp.ne.s32.totalorder 0, 0
  // Predicated region
  $region22: #{mlp_forward.4} parent=0 // pred_check
    %p199 = pneg %p198
  $region23: #{mlp_forward.4} parent=0 // pred_check_branch
    %201 = sbr.rel (%p199) target = $region25
  $region24: #{mlp_forward.4} parent=0 // pred_region
    %v202 = vadd.f32 %v145, %v148
    %v203 = vrot.slane %v202, 4
    %v204 = vadd.f32 %v202, %v203
    %v205 = vrot.slane %v204, 2
    %v206 = vadd.f32 %v204, %v205
    %v207 = vrot.slane %v206, 1
    %v208 = vadd.f32 %v206, %v207
    %209 = vst [vmem:[%s5] sm:$0x1] %v208
    %v210 = vmul.f32 %v145, %v145
    %v211 = vmul.f32 %v148, %v148
    %v212 = vadd.f32 %v210, %v211
    %v213 = vrot.slane %v212, 4
    %v214 = vadd.f32 %v212, %v213
    %v215 = vrot.slane %v214, 2
    %v216 = vadd.f32 %v214, %v215
    %v217 = vrot.slane %v216, 1
    %v218 = vadd.f32 %v216, %v217
    %219 = vst [vmem:[%s6] sm:$0x1] %v218
  $region25: #{mlp_forward.4} parent=0 // pred_fallthru
    _
  // Predicated region
  $region26: #{mlp_forward.4} parent=0 // pred_check
    _
  $region27: #{mlp_forward.4} parent=0 // pred_check_branch
    %221 = sbr.rel (0) target = $region29
  $region28: #{mlp_forward.4} parent=0 // pred_region
    _
  $region29: #{mlp_forward.4} parent=0 // pred_fallthru
    _
  // Predicated region
  $region30: #{mlp_forward.4} parent=0 // pred_check
    _
  $region31: #{mlp_forward.4} parent=0 // pred_check_branch
    %223 = sbr.rel (0) target = $region33
  $region32: #{mlp_forward.4} parent=0 // pred_region
    _
  $region33: #{mlp_forward.4} parent=0 // pred_fallthru
    _
  // Predicated region
  $region34: #{mlp_forward.4} parent=0 // pred_check
    _
  $region35: #{mlp_forward.4} parent=0 // pred_check_branch
    %225 = sbr.rel (0) target = $region37
  $region36: #{mlp_forward.4} parent=0 // pred_region
    _
  $region37: #{mlp_forward.4} parent=0 // pred_fallthru
    _
  // Predicated region
  $region38: #{mlp_forward.4} parent=0 // pred_check
    _
  $region39: #{mlp_forward.4} parent=0 // pred_check_branch
    %227 = sbr.rel (0) target = $region41
  $region40: #{mlp_forward.4} parent=0 // pred_region
    _
  $region41: #{mlp_forward.4} parent=0 // pred_fallthru
    _
  // Predicated region
  $region42: #{mlp_forward.4} parent=0 // pred_check
    _
  $region43: #{mlp_forward.4} parent=0 // pred_check_branch
    %229 = sbr.rel (0) target = $region45
  $region44: #{mlp_forward.4} parent=0 // pred_region
    _
  $region45: #{mlp_forward.4} parent=0 // pred_fallthru
    _
  // Predicated region
  $region46: #{mlp_forward.4} parent=0 // pred_check
    _
  $region47: #{mlp_forward.4} parent=0 // pred_check_branch
    %231 = sbr.rel (0) target = $region49
  $region48: #{mlp_forward.4} parent=0 // pred_region
    _
  $region49: #{mlp_forward.4} parent=0 // pred_fallthru
    _

// kernel: mlp_forward.3
$region0: #{mlp_forward.3}
  #allocation0 [shape = 'u32[]', space=smem, size = 0x4, offset = 0x4, fixed_abs, tag = 'smem constant byte address 0x4 - core index']
  #allocation1 [shape = 'u32[144,128]{1,0:T(1,128)}', space=vmem, size = 0x12000, scoped, tag = 'internal scratch']
  %s0 = inlined_call_operand.vmem [shape: f32[16,16], index: 0, kind: input, shape index: {}]
  %s1 = inlined_call_operand.hbm [shape: bf16[16,128], index: 1, kind: input, shape index: {}]
  %s2 = inlined_call_operand.vmem [shape: bf16[16,128], index: 2, kind: output, shape index: {0}]
  %s3 = inlined_call_operand.vmem [shape: f32[1,1,128], index: 3, kind: output, shape index: {1}]
  %s4 = inlined_call_operand.vmem [shape: f32[1,1,128], index: 4, kind: output, shape index: {2}]
  %5 = xla_tuple %s2, %s3, %s4
  %s6 = sld [smem:[#allocation0]]
  $region46: #{mlp_forward.3} parent=0
    _
  %s8 = ssub.s32 1, %s6
  %s9 = scalar_select 0, %s8, %s6
  $region1: #{mlp_forward.3} parent=0
    #allocation2 [shape = 'u8[4096]{0}', space=vmem, size = 0x1000, scoped, tag = 'input window, operand 1, single buffered']
    #allocation3 [shape = 's32[1]{0}', space=sflag, size = 0x4, scoped, tag = 'scoped memory for mlp_forward.3']
    %10 = vsyncpa [#allocation3], 0
    // Predicated region
    $region2: #{mlp_forward.3} parent=1 // pred_check
      _
    $region3: #{mlp_forward.3} parent=1 // pred_check_branch
      %12 = sbr.rel (0) target = $region5
    $region4: #{mlp_forward.3} parent=1 // pred_region
      _
    $region5: #{mlp_forward.3} parent=1 // pred_fallthru
      _
    // Predicated region
    $region6: #{mlp_forward.3} parent=1 // pred_check
      _
    $region7: #{mlp_forward.3} parent=1 // pred_check_branch
      %14 = sbr.rel (0) target = $region9
    $region8: #{mlp_forward.3} parent=1 // pred_region
      %s16 = ssub.s32 128, 128
      %17 = vsyncadd [#allocation3], %s16
      %s18 = sshll.u32 [#allocation2], 4
      %s19 = int_to_ptr.vmem [resolvable:$true] %s18
      %24 = dma.hbm_to_vmem [thread:$0]  %s1, 128, %s19, [#allocation3], 64, 64, 4
    $region9: #{mlp_forward.3} parent=1 // pred_fallthru
      _
    // Predicated region
    $region10: #{mlp_forward.3} parent=1 // pred_check
      _
    $region11: #{mlp_forward.3} parent=1 // pred_check_branch
      %26 = sbr.rel (0) target = $region13
    $region12: #{mlp_forward.3} parent=1 // pred_region
      %27 = dma.done [#allocation3], 128
    $region13: #{mlp_forward.3} parent=1 // pred_fallthru
      _
    %v29 = vld [vmem:[%s0] sm:$0xff]
    %v30 = vld [vmem:[%s0 + $0x8] sm:$0xff]
    %v31 = vpack.c.bf16 %v30, %v29
    %v32 = vld [vmem:[#allocation2] sm:$0xf]
    %v33 = vld [vmem:[#allocation2 + $0x4] sm:$0xf]
    %v36 = vunpack.c.l.b16 %v32
    %v37 = vunpack.c.l.b16 %v33
    %v38 = vpack.c.b16 %v37, %v36
    %vm40 = vcmask 130048
    %v42 = vsel %vm40, %v31, 0
    %44 = vmatprep.subr.bf16.mxu0 0
    %45 = vmatpush1.bf16.msra.mxu0 0
    %46 = vmatprep.subr.bf16.mxu0 0
    %47 = vmatpush1.bf16.msra.mxu0 0
    %48 = vmatprep.subr.bf16.mxu0 0
    %49 = vmatpush1.bf16.msra.mxu0 0
    %50 = vmatprep.subr.bf16.mxu0 0
    %51 = vmatpush1.bf16.msra.mxu0 0
    %52 = vmatprep.subr.bf16.mxu0 0
    %53 = vmatpush1.bf16.msra.mxu0 0
    %54 = vmatprep.subr.bf16.mxu0 0
    %55 = vmatpush1.bf16.msra.mxu0 0
    %56 = vmatprep.subr.bf16.mxu0 0
    %57 = vmatpush1.bf16.msra.mxu0 0
    %58 = vmatprep.subr.bf16.mxu0 0
    %59 = vmatpush1.bf16.msra.mxu0 %v38
    %60 = vmatprep.subr.bf16.mxu0 0
    %61 = vmatpush2.bf16.msra.mxu0 0
    %62 = vmatprep.subr.bf16.mxu0 0
    %63 = vmatpush2.bf16.msra.mxu0 0
    %64 = vmatprep.subr.bf16.mxu0 0
    %65 = vmatpush2.bf16.msra.mxu0 0
    %66 = vmatprep.subr.bf16.mxu0 0
    %67 = vmatpush2.bf16.msra.mxu0 0
    %68 = vmatprep.subr.bf16.mxu0 0
    %69 = vmatpush2.bf16.msra.mxu0 0
    %70 = vmatprep.subr.bf16.mxu0 0
    %71 = vmatpush2.bf16.msra.mxu0 0
    %72 = vmatprep.subr.bf16.mxu0 0
    %73 = vmatpush2.bf16.msra.mxu0 0
    %74 = vmatprep.subr.bf16.mxu0 0
    %75 = vmatpush2.bf16.msra.mxu0 0
    %76 = vmatprep.mubr.bf16.mxu0 0
    %77 = vmatmul.mubr.bf16.gmra.mxu0 %v42
    %v78 = vpop.f32.mrf.mxu0
    %v79 = vadd.f32 0.0, %v78
    %v80 = vpop.f32.mrf.mxu0
    %v81 = vpop.f32.mrf.mxu0
    %v82 = vadd.f32 0.0, %v81
    %v83 = vpop.f32.mrf.mxu0
    %84 = vdwg.mxu0
    %v85 = vpack.c.bf16 %v82, %v79
    %v87 = vunpack.c.l.b16 %v85
    %v88 = vunpack.c.h.b16 %v85
    %v89 = vpack.c.b16 %v87, %v87
    %v90 = vpack.c.b16 %v88, %v88
    %93 = vst [vmem:[%s2] sm:$0xf] %v89
    %94 = vst [vmem:[%s2 + $0x4] sm:$0xf] %v90
    %p95 = scmp.eq.s32.totalorder 0, 0
    // Predicated region
    $region14: #{mlp_forward.3} parent=1 // pred_check
      %p96 = pneg %p95
    $region15: #{mlp_forward.3} parent=1 // pred_check_branch
      %98 = sbr.rel (%p96) target = $region17
    $region16: #{mlp_forward.3} parent=1 // pred_region
      %s99 = smul.u32 0, 16
      %v100 = vlaneseq
      %v101 = vshrl.u32 %v100, 7
      %v102 = vadd.s32 %v101, 8
      %v103 = vstv %s99
      %v104 = vadd.s32 %v103, %v101
      %v105 = vadd.s32 %v103, %v102
      %vm106 = vcmp.lt.s32.totalorder %v104, 8
      %vm107 = vcmp.lt.s32.totalorder %v105, 8
      %v108 = vsel %vm106, 1, 0
      %v109 = vsel %vm107, 1, 0
      %v110 = vcvt.s32.f32 %v108
      %v111 = vcvt.s32.f32 %v109
      %v112 = vmul.f32 %v79, %v110
      %v113 = vmul.f32 %v82, %v111
      %v114 = vadd.f32 %v112, %v113
      %v115 = vrot.slane %v114, 4
      %v116 = vadd.f32 %v114, %v115
      %v117 = vrot.slane %v116, 2
      %v118 = vadd.f32 %v116, %v117
      %v119 = vrot.slane %v118, 1
      %v120 = vadd.f32 %v118, %v119
      %121 = vst [vmem:[%s3] sm:$0x1] %v120
      %v122 = vmul.f32 %v112, %v79
      %v123 = vmul.f32 %v113, %v82
      %v124 = vadd.f32 %v122, %v123
      %v125 = vrot.slane %v124, 4
      %v126 = vadd.f32 %v124, %v125
      %v127 = vrot.slane %v126, 2
      %v128 = vadd.f32 %v126, %v127
      %v129 = vrot.slane %v128, 1
      %v130 = vadd.f32 %v128, %v129
      %131 = vst [vmem:[%s4] sm:$0x1] %v130
    $region17: #{mlp_forward.3} parent=1 // pred_fallthru
      _
    %p132 = scmp.ne.s32.totalorder 0, 0
    // Predicated region
    $region18: #{mlp_forward.3} parent=1 // pred_check
      %p133 = pneg %p132
    $region19: #{mlp_forward.3} parent=1 // pred_check_branch
      %135 = sbr.rel (%p133) target = $region21
    $region20: #{mlp_forward.3} parent=1 // pred_region
      %v136 = vadd.f32 %v79, %v82
      %v137 = vrot.slane %v136, 4
      %v138 = vadd.f32 %v136, %v137
      %v139 = vrot.slane %v138, 2
      %v140 = vadd.f32 %v138, %v139
      %v141 = vrot.slane %v140, 1
      %v142 = vadd.f32 %v140, %v141
      %143 = vst [vmem:[%s3] sm:$0x1] %v142
      %v144 = vmul.f32 %v79, %v79
      %v145 = vmul.f32 %v82, %v82
      %v146 = vadd.f32 %v144, %v145
      %v147 = vrot.slane %v146, 4
      %v148 = vadd.f32 %v146, %v147
      %v149 = vrot.slane %v148, 2
      %v150 = vadd.f32 %v148, %v149
      %v151 = vrot.slane %v150, 1
      %v152 = vadd.f32 %v150, %v151
      %153 = vst [vmem:[%s4] sm:$0x1] %v152
    $region21: #{mlp_forward.3} parent=1 // pred_fallthru
      _
    // Predicated region
    $region22: #{mlp_forward.3} parent=1 // pred_check
      _
    $region23: #{mlp_forward.3} parent=1 // pred_check_branch
      %155 = sbr.rel (0) target = $region25
    $region24: #{mlp_forward.3} parent=1 // pred_region
      _
    $region25: #{mlp_forward.3} parent=1 // pred_fallthru
      _
    // Predicated region
    $region26: #{mlp_forward.3} parent=1 // pred_check
      _
    $region27: #{mlp_forward.3} parent=1 // pred_check_branch
      %157 = sbr.rel (0) target = $region29
    $region28: #{mlp_forward.3} parent=1 // pred_region
      _
    $region29: #{mlp_forward.3} parent=1 // pred_fallthru
      _
    // Predicated region
    $region30: #{mlp_forward.3} parent=1 // pred_check
      _
    $region31: #{mlp_forward.3} parent=1 // pred_check_branch
      %159 = sbr.rel (0) target = $region33
    $region32: #{mlp_forward.3} parent=1 // pred_region
      _
    $region33: #{mlp_forward.3} parent=1 // pred_fallthru
      _
    // Predicated region
    $region34: #{mlp_forward.3} parent=1 // pred_check
      _
    $region35: #{mlp_forward.3} parent=1 // pred_check_branch
      %161 = sbr.rel (0) target = $region37
    $region36: #{mlp_forward.3} parent=1 // pred_region
      _
    $region37: #{mlp_forward.3} parent=1 // pred_fallthru
      _
    // Predicated region
    $region38: #{mlp_forward.3} parent=1 // pred_check
      _
    $region39: #{mlp_forward.3} parent=1 // pred_check_branch
      %163 = sbr.rel (0) target = $region41
    $region40: #{mlp_forward.3} parent=1 // pred_region
      _
    $region41: #{mlp_forward.3} parent=1 // pred_fallthru
      _
    // Predicated region
    $region42: #{mlp_forward.3} parent=1 // pred_check
      _
    $region43: #{mlp_forward.3} parent=1 // pred_check_branch
      %165 = sbr.rel (0) target = $region45
    $region44: #{mlp_forward.3} parent=1 // pred_region
      _
    $region45: #{mlp_forward.3} parent=1 // pred_fallthru
      _
    %166 = vsyncpa [#allocation3], 1

// kernel: mlp_forward.5
$region0: #{mlp_forward.5}
  #allocation0 [shape = 'u32[]', space=smem, size = 0x4, offset = 0x4, fixed_abs, tag = 'smem constant byte address 0x4 - core index']
  #allocation1 [shape = 'u32[144,128]{1,0:T(1,128)}', space=vmem, size = 0x12000, scoped, tag = 'internal scratch']
  %s0 = inlined_call_operand.vmem [shape: bf16[16,128], index: 0, kind: input, shape index: {}]
  %s1 = inlined_call_operand.vmem [shape: f32[1,128], index: 1, kind: input, shape index: {}]
  %s2 = inlined_call_operand.vmem [shape: f32[1,128], index: 2, kind: input, shape index: {}]
  %s3 = inlined_call_operand.vmem [shape: bf16[128,128], index: 3, kind: input, shape index: {}]
  %s4 = inlined_call_operand.vmem [shape: f32[1,128], index: 4, kind: input, shape index: {}]
  %s5 = inlined_call_operand.vmem [shape: f32[16,128], index: 5, kind: output, shape index: {}]
  %s6 = sld [smem:[#allocation0]]
  $region30: #{mlp_forward.5} parent=0
    _
  %s8 = ssub.s32 1, %s6
  %s9 = scalar_select 0, %s8, %s6
  // Predicated region
  $region2: #{mlp_forward.5} parent=0 // pred_check
    _
  $region3: #{mlp_forward.5} parent=0 // pred_check_branch
    %11 = sbr.rel (0) target = $region5
  $region4: #{mlp_forward.5} parent=0 // pred_region
    _
  $region5: #{mlp_forward.5} parent=0 // pred_fallthru
    _
  // Predicated region
  $region6: #{mlp_forward.5} parent=0 // pred_check
    _
  $region7: #{mlp_forward.5} parent=0 // pred_check_branch
    %13 = sbr.rel (0) target = $region9
  $region8: #{mlp_forward.5} parent=0 // pred_region
    _
  $region9: #{mlp_forward.5} parent=0 // pred_fallthru
    _
  // Predicated region
  $region10: #{mlp_forward.5} parent=0 // pred_check
    _
  $region11: #{mlp_forward.5} parent=0 // pred_check_branch
    %15 = sbr.rel (0) target = $region13
  $region12: #{mlp_forward.5} parent=0 // pred_region
    _
  $region13: #{mlp_forward.5} parent=0 // pred_fallthru
    _
  // Predicated region
  $region14: #{mlp_forward.5} parent=0 // pred_check
    _
  $region15: #{mlp_forward.5} parent=0 // pred_check_branch
    %17 = sbr.rel (0) target = $region17
  $region16: #{mlp_forward.5} parent=0 // pred_region
    _
  $region17: #{mlp_forward.5} parent=0 // pred_fallthru
    _
  // Predicated region
  $region18: #{mlp_forward.5} parent=0 // pred_check
    _
  $region19: #{mlp_forward.5} parent=0 // pred_check_branch
    %19 = sbr.rel (0) target = $region21
  $region20: #{mlp_forward.5} parent=0 // pred_region
    _
  $region21: #{mlp_forward.5} parent=0 // pred_fallthru
    _
  %v21 = vld [vmem:[%s0] sm:$0xf]
  %v22 = vld [vmem:[%s0 + $0x4] sm:$0xf]
  %v23 = vunpack.c.l.bf16 %v21
  %v24 = vunpack.c.l.bf16 %v22
  %v25 = vld [vmem:[%s1] sm:$0x1]
  %v27 = vlaneseq
  %v28 = vshrl.u32 %v27, 7
  %v29 = vsub.s32 0, %v28
  %v30 = vrot.slane %v25, %v29
  %v32 = vmul.f32 %v23, %v30
  %v33 = vmul.f32 %v24, %v30
  %v34 = vld [vmem:[%s2] sm:$0x1]
  %v36 = vlaneseq
  %v37 = vshrl.u32 %v36, 7
  %v38 = vsub.s32 0, %v37
  %v39 = vrot.slane %v34, %v38
  %v41 = vadd.f32 %v32, %v39
  %v42 = vadd.f32 %v33, %v39
  %v43 = vmax.f32 %v41, 0.0
  %v44 = vmax.f32 %v42, 0.0
  %v45 = vpack.c.bf16 %v44, %v43
  %v46 = vld [vmem:[%s3] sm:$0xf]
  %v47 = vld [vmem:[%s3 + $0x4] sm:$0xf]
  %v48 = vld [vmem:[%s3 + $0x8] sm:$0xf]
  %v49 = vld [vmem:[%s3 + $0xc] sm:$0xf]
  %v50 = vld [vmem:[%s3 + $0x10] sm:$0xf]
  %v51 = vld [vmem:[%s3 + $0x14] sm:$0xf]
  %v52 = vld [vmem:[%s3 + $0x18] sm:$0xf]
  %v53 = vld [vmem:[%s3 + $0x1c] sm:$0xf]
  %v54 = vld [vmem:[%s3 + $0x20] sm:$0xf]
  %v55 = vld [vmem:[%s3 + $0x24] sm:$0xf]
  %v56 = vld [vmem:[%s3 + $0x28] sm:$0xf]
  %v57 = vld [vmem:[%s3 + $0x2c] sm:$0xf]
  %v58 = vld [vmem:[%s3 + $0x30] sm:$0xf]
  %v59 = vld [vmem:[%s3 + $0x34] sm:$0xf]
  %v60 = vld [vmem:[%s3 + $0x38] sm:$0xf]
  %v61 = vld [vmem:[%s3 + $0x3c] sm:$0xf]
  %v62 = vld [vmem:[%s4] sm:$0x1]
  %v64 = vlaneseq
  %v65 = vshrl.u32 %v64, 7
  %v66 = vsub.s32 0, %v65
  %v67 = vrot.slane %v62, %v66
  %v85 = vunpack.c.l.b16 %v46
  %v86 = vunpack.c.l.b16 %v47
  %v87 = vunpack.c.l.b16 %v48
  %v88 = vunpack.c.l.b16 %v49
  %v89 = vunpack.c.l.b16 %v50
  %v90 = vunpack.c.l.b16 %v51
  %v91 = vunpack.c.l.b16 %v52
  %v92 = vunpack.c.l.b16 %v53
  %v93 = vunpack.c.l.b16 %v54
  %v94 = vunpack.c.l.b16 %v55
  %v95 = vunpack.c.l.b16 %v56
  %v96 = vunpack.c.l.b16 %v57
  %v97 = vunpack.c.l.b16 %v58
  %v98 = vunpack.c.l.b16 %v59
  %v99 = vunpack.c.l.b16 %v60
  %v100 = vunpack.c.l.b16 %v61
  %v101 = vpack.c.b16 %v86, %v85
  %v102 = vpack.c.b16 %v88, %v87
  %v103 = vpack.c.b16 %v90, %v89
  %v104 = vpack.c.b16 %v92, %v91
  %v105 = vpack.c.b16 %v94, %v93
  %v106 = vpack.c.b16 %v96, %v95
  %v107 = vpack.c.b16 %v98, %v97
  %v108 = vpack.c.b16 %v100, %v99
  %117 = vmatprep.subr.bf16.mxu0 0
  %118 = vmatpush1.bf16.msra.mxu0 %v108
  %119 = vmatprep.subr.bf16.mxu0 0
  %120 = vmatpush1.bf16.msra.mxu0 %v107
  %121 = vmatprep.subr.bf16.mxu0 0
  %122 = vmatpush1.bf16.msra.mxu0 %v106
  %123 = vmatprep.subr.bf16.mxu0 0
  %124 = vmatpush1.bf16.msra.mxu0 %v105
  %125 = vmatprep.subr.bf16.mxu0 0
  %126 = vmatpush1.bf16.msra.mxu0 %v104
  %127 = vmatprep.subr.bf16.mxu0 0
  %128 = vmatpush1.bf16.msra.mxu0 %v103
  %129 = vmatprep.subr.bf16.mxu0 0
  %130 = vmatpush1.bf16.msra.mxu0 %v102
  %131 = vmatprep.subr.bf16.mxu0 0
  %132 = vmatpush1.bf16.msra.mxu0 %v101
  %133 = vmatprep.subr.bf16.mxu0 0
  %134 = vmatpush2.bf16.msra.mxu0 0
  %135 = vmatprep.subr.bf16.mxu0 0
  %136 = vmatpush2.bf16.msra.mxu0 0
  %137 = vmatprep.subr.bf16.mxu0 0
  %138 = vmatpush2.bf16.msra.mxu0 0
  %139 = vmatprep.subr.bf16.mxu0 0
  %140 = vmatpush2.bf16.msra.mxu0 0
  %141 = vmatprep.subr.bf16.mxu0 0
  %142 = vmatpush2.bf16.msra.mxu0 0
  %143 = vmatprep.subr.bf16.mxu0 0
  %144 = vmatpush2.bf16.msra.mxu0 0
  %145 = vmatprep.subr.bf16.mxu0 0
  %146 = vmatpush2.bf16.msra.mxu0 0
  %147 = vmatprep.subr.bf16.mxu0 0
  %148 = vmatpush2.bf16.msra.mxu0 0
  %149 = vmatprep.mubr.bf16.mxu0 0
  %150 = vmatmul.mubr.bf16.gmra.mxu0 %v45
  %v151 = vpop.f32.mrf.mxu0
  %v152 = vadd.f32 %v67, %v151
  %v153 = vpop.f32.mrf.mxu0
  %v154 = vpop.f32.mrf.mxu0
  %v155 = vadd.f32 %v67, %v154
  %v156 = vpop.f32.mrf.mxu0
  %157 = vdwg.mxu0
  %158 = vst [vmem:[%s5] sm:$0xff] %v152
  %159 = vst [vmem:[%s5 + $0x8] sm:$0xff] %v155
  // Predicated region
  $region22: #{mlp_forward.5} parent=0 // pred_check
    _
  $region23: #{mlp_forward.5} parent=0 // pred_check_branch
    %161 = sbr.rel (0) target = $region25
  $region24: #{mlp_forward.5} parent=0 // pred_region
    _
  $region25: #{mlp_forward.5} parent=0 // pred_fallthru
    _
  // Predicated region
  $region26: #{mlp_forward.5} parent=0 // pred_check
    _
  $region27: #{mlp_forward.5} parent=0 // pred_check_branch
    %163 = sbr.rel (0) target = $region29
  $region28: #{mlp_forward.5} parent=0 // pred_region
    _
  $region29: #{mlp_forward.5} parent=0 // pred_fallthru
    _

</llo_original>
